<compile_context>
chip_gen: v7x
topology: tpu7x:2x2x1
jax: 0.10.0
libtpu: 0.0.40
codegen_flags: <defaults>
</compile_context>

<pallas_src>
import functools

import numpy as np
import jax
import jax.numpy as jnp
from jax.experimental import pallas as pl
from jax.experimental.pallas import tpu as pltpu


# ----------------------- shared-range-reduction sincos ----------------------
# Cody-Waite split of pi/2 (constants exactly representable in float32).
_HP1 = 1.5703125
_HP2 = 4.8375129699707031e-4
_HP3 = 7.5497899487e-8
_TWO_OVER_PI = 0.6366197723675814


def _sincos(x):
    """Return (sin(x), cos(x)) sharing one range reduction.

    Accurate to a few 1e-7 absolute for |x| up to a few hundred, far inside
    the 5e-5 test tolerance for the argument magnitudes produced here.
    """
    kf = jnp.floor(x * _TWO_OVER_PI + 0.5)          # nearest quadrant
    q = kf.astype(jnp.int32) & 3                    # quadrant index in [0, 3]
    r = x - kf * _HP1
    r = r - kf * _HP2
    r = r - kf * _HP3                               # |r| <= pi/4 (+eps)
    r2 = r * r
    # Cephes single-precision minimax polynomials on [-pi/4, pi/4].
    sin_r = r + r * r2 * (-1.6666654611e-1
                          + r2 * (8.3321608736e-3
                                  + r2 * (-1.9515295891e-4)))
    cos_r = 1.0 - 0.5 * r2 + r2 * r2 * (4.166664568298827e-2
                                        + r2 * (-1.388731625493765e-3
                                                + r2 * 2.443315711809948e-5))
    swap = (q & 1) == 1
    s_base = jnp.where(swap, cos_r, sin_r)
    c_base = jnp.where(swap, sin_r, cos_r)
    sin_x = jnp.where(q >= 2, -s_base, s_base)
    cos_x = jnp.where((q == 1) | (q == 2), -c_base, c_base)
    return sin_x, cos_x


# --------------------------------- kernel -----------------------------------
def _pe_kernel(params_ref, out_ref, *, H, W, TH, C):
    """Compute one (2C, TH*W) tile of the positional encoding.

    params_ref: (C, 2) float32; col0 = 2*pi*Gx, col1 = 2*pi*Gy.
    out_ref:    (2C, TH*W); channels on sublanes, flattened (row*W + col)
                spatial index on lanes -> lane-dense unmasked stores.
                Rows [0:C] hold sin, rows [C:2C] hold cos.
    """
    i = pl.program_id(0)

    gx = params_ref[:, 0:1]                          # (C, 1)
    gy = params_ref[:, 1:2]                          # (C, 1)

    # Global flat spatial index for this tile: n = row*W + col.
    n = jax.lax.broadcasted_iota(jnp.int32, (1, TH * W), 1) + i * (TH * W)
    if W & (W - 1) == 0:                             # power-of-two: shift/mask
        row = n >> (W.bit_length() - 1)
        col = n & (W - 1)
    elif H * W < (1 << 21):                          # float mul+floor (exact here)
        row = jnp.floor((n.astype(jnp.float32) + 0.5) * (1.0 / W)).astype(jnp.int32)
        col = n - row * W
    else:                                            # general fallback
        row = n // W
        col = n - row * W

    # Folded affine: ((idx + 0.5)/N)*2 - 1 == idx*(2/N) + (1/N - 1).
    xn = col.astype(jnp.float32) * (2.0 / W) + (1.0 / W - 1.0)   # (1, TH*W)
    yn = row.astype(jnp.float32) * (2.0 / H) + (1.0 / H - 1.0)   # (1, TH*W)

    # Shared argument for both halves: arg = 2*pi*(Gx*x + Gy*y).
    arg = gx * xn + gy * yn                                       # (C, TH*W)
    s, c = _sincos(arg)
    out_ref[0:C, :] = s.astype(out_ref.dtype)
    out_ref[C:2 * C, :] = c.astype(out_ref.dtype)


# ------------------------------ tiling helpers -------------------------------
def _is_dual_tensorcore_chip():
    """Best-effort detection of v7x-class chips (2 TensorCores per chip)."""
    try:
        kind = jax.devices()[0].device_kind.lower()
    except Exception:
        return False
    return ("v7" in kind) or ("7x" in kind)


def _choose_tile_h(h, w, twoc, target_steps=1, max_block_bytes=8 << 20):
    """Pick a row-tile that divides H, is lane-dense (TH*W % 128 == 0), and
    fits the block budget; among those prefer the largest tile that still
    yields >= target_steps grid steps."""
    divisors = [th for th in range(1, h + 1) if h % th == 0]
    lane_ok = [th for th in divisors if (th * w) % 128 == 0]
    if not lane_ok:
        # Only a single full-array block is legal when W*divisor never hits a
        # lane multiple.  Fine for the sizes used here.
        # TODO(synk): pad W to a multiple of 128 with masked stores for huge
        # non-lane-aligned shapes instead of one monolithic block.
        return h
    fitting = [th for th in lane_ok if th * w * twoc * 4 <= max_block_bytes]
    pool = fitting if fitting else [min(lane_ok)]    # never exceed budget by choice
    pref = [th for th in pool if h // th >= target_steps]
    return max(pref) if pref else max(pool)


# --------------------------------- wrapper -----------------------------------
def position_embedding_random(gaussian_matrix, size, *, tile_h=None,
                              out_dtype=jnp.float32):
    """JAX/Pallas equivalent of PositionEmbeddingRandom.forward(size).

    Returns an array of shape (2 * num_pos_feats, H, W) in `out_dtype`
    (float32 by default to match the PyTorch module; bf16 halves the store
    traffic on store-bound chips if the consumer tolerates it).
    """
    h, w = size
    c = gaussian_matrix.shape[1]
    twoc = 2 * c

    if tile_h is None:
        if _is_dual_tensorcore_chip():
            # >= 2 steps per TensorCore once the output is non-trivial so each
            # core overlaps output-block writeback with compute.
            target_steps = 4 if twoc * h * w * 4 > (1 << 20) else 2
        else:
            # Single TensorCore (v5e/v6e): largest legal block, no per-step
            # overhead for the small SAM grid sizes.
            target_steps = 1
        tile_h = _choose_tile_h(h, w, twoc, target_steps=target_steps)
    assert h % tile_h == 0

    # Fold 2*pi into the Gaussian projection once: (C, 2) = [2piGx, 2piGy].
    params = (2.0 * np.pi) * gaussian_matrix.astype(jnp.float32).T       # (C, 2)

    kernel = functools.partial(_pe_kernel, H=h, W=w, TH=tile_h, C=c)

    out_bytes = int(np.dtype(out_dtype).itemsize) * twoc * h * w
    cost = pl.CostEstimate(
        flops=35 * c * h * w,                 # shared-arg FMA + sincos poly
        transcendentals=2 * c * h * w,
        bytes_accessed=out_bytes + 4 * c * 2)

    out_flat = pl.pallas_call(
        kernel,
        out_shape=jax.ShapeDtypeStruct((twoc, h * w), out_dtype),
        grid=(h // tile_h,),
        in_specs=[pl.BlockSpec((c, 2), lambda i: (0, 0))],
        out_specs=pl.BlockSpec((twoc, tile_h * w), lambda i: (0, i)),
        compiler_params=pltpu.CompilerParams(
            dimension_semantics=("parallel",),
            vmem_limit_bytes=32 * 1024 * 1024),
        cost_estimate=cost,
    )(params)

    # Free reshape (no transpose): (2C, H*W) -> (2C, H, W) already matches
    # PyTorch's pe.permute(2, 0, 1) layout.
    return out_flat.reshape(twoc, h, w)


# -------------------------------- reference ----------------------------------
def _reference(gaussian_matrix, size):
    """Pure-JAX reference mirroring the PyTorch module exactly."""
    h, w = size
    grid = jnp.ones((h, w), dtype=jnp.float32)
    y_embed = (jnp.cumsum(grid, axis=0) - 0.5) / h
    x_embed = (jnp.cumsum(grid, axis=1) - 0.5) / w
    coords = jnp.stack([x_embed, y_embed], axis=-1)          # (H, W, 2)
    coords = 2.0 * coords - 1.0
    coords = coords @ gaussian_matrix                         # (H, W, C)
    coords = 2.0 * np.pi * coords
    pe = jnp.concatenate([jnp.sin(coords), jnp.cos(coords)], axis=-1)
    return jnp.transpose(pe, (2, 0, 1))                       # (2C, H, W)


# TODO(synk): forward_with_coords (point-prompt encoding path) is not
# translated here; only forward(size) is implemented.

if __name__ == "__main__":
    num_pos_feats = 64
    scale = 1.0  # module default when scale is None or <= 0

    key = jax.random.PRNGKey(0)
    # buffer: positional_encoding_gaussian_matrix, shape (2, num_pos_feats)
    gaussian_matrix = scale * jax.random.normal(
        key, (2, num_pos_feats), dtype=jnp.float32)

    # Power-of-two W (shift/mask path) and non-power-of-two W (float path /
    # full-array block fallback).
    for (h, w) in [(16, 16), (64, 64), (24, 24)]:
        pe = position_embedding_random(gaussian_matrix, (h, w))
        pe = jax.block_until_ready(pe)

        ref = _reference(gaussian_matrix, (h, w))
        assert pe.shape == (2 * num_pos_feats, h, w)
        assert pe.dtype == jnp.float32
        np.testing.assert_allclose(np.asarray(pe), np.asarray(ref),
                                   rtol=1e-5, atol=5e-5)

    print("KERNEL_OK")
</pallas_src>

<mosaic_0001>
module attributes {stable_mosaic.version = 11 : i64} {
  func.func @_pe_kernel(%arg0: i32, %arg1: memref<64x2xf32, #tpu.memory_space<vmem>>, %arg2: memref<128x256xf32, #tpu.memory_space<vmem>>) attributes {dimension_semantics = [#tpu.dimension_semantics<parallel>], iteration_bounds = array<i64: 1>, scalar_prefetch = 0 : i64, scratch_operands = 0 : i64, tpu.core_type = #tpu.core_type<tc>, window_params = [{pipeline_mode = #tpu.pipeline_mode<synchronous>, transform_indices = @transform_0, window_bounds = array<i64: 64, 2>}, {transform_indices = @transform_1, window_bounds = array<i64: 128, 256>}]} {
    %c0 = arith.constant 0 : index
    %c0_0 = arith.constant 0 : index
    %0 = vector.load %arg1[%c0, %c0_0] : memref<64x2xf32, #tpu.memory_space<vmem>>, vector<64x1xf32>
    %c0_1 = arith.constant 0 : index
    %c1 = arith.constant 1 : index
    %1 = vector.load %arg1[%c0_1, %c1] : memref<64x2xf32, #tpu.memory_space<vmem>>, vector<64x1xf32>
    %2 = tpu.iota {dimensions = array<i32: 1>} : vector<1x256xi32>
    %c256_i32 = arith.constant 256 : i32
    %3 = arith.muli %arg0, %c256_i32 : i32
    %4 = vector.broadcast %3 : i32 to vector<1x256xi32>
    %5 = arith.addi %2, %4 : vector<1x256xi32>
    %c4_i32 = arith.constant 4 : i32
    %6 = vector.broadcast %c4_i32 : i32 to vector<1x256xi32>
    %7 = arith.shrsi %5, %6 : vector<1x256xi32>
    %c15_i32 = arith.constant 15 : i32
    %8 = vector.broadcast %c15_i32 : i32 to vector<1x256xi32>
    %9 = arith.andi %5, %8 : vector<1x256xi32>
    %10 = arith.sitofp %9 : vector<1x256xi32> to vector<1x256xf32>
    %cst = arith.constant 1.250000e-01 : f32
    %11 = vector.broadcast %cst : f32 to vector<1x256xf32>
    %12 = arith.mulf %10, %11 : vector<1x256xf32>
    %cst_2 = arith.constant -9.375000e-01 : f32
    %13 = vector.broadcast %cst_2 : f32 to vector<1x256xf32>
    %14 = arith.addf %12, %13 : vector<1x256xf32>
    %15 = arith.sitofp %7 : vector<1x256xi32> to vector<1x256xf32>
    %cst_3 = arith.constant 1.250000e-01 : f32
    %16 = vector.broadcast %cst_3 : f32 to vector<1x256xf32>
    %17 = arith.mulf %15, %16 : vector<1x256xf32>
    %cst_4 = arith.constant -9.375000e-01 : f32
    %18 = vector.broadcast %cst_4 : f32 to vector<1x256xf32>
    %19 = arith.addf %17, %18 : vector<1x256xf32>
    %20 = vector.broadcast %0 : vector<64x1xf32> to vector<64x256xf32>
    %21 = vector.broadcast %14 : vector<1x256xf32> to vector<64x256xf32>
    %22 = arith.mulf %20, %21 : vector<64x256xf32>
    %23 = vector.broadcast %1 : vector<64x1xf32> to vector<64x256xf32>
    %24 = vector.broadcast %19 : vector<1x256xf32> to vector<64x256xf32>
    %25 = arith.mulf %23, %24 : vector<64x256xf32>
    %26 = arith.addf %22, %25 : vector<64x256xf32>
    %cst_5 = arith.constant 0.636619746 : f32
    %27 = vector.broadcast %cst_5 : f32 to vector<64x256xf32>
    %28 = arith.mulf %26, %27 : vector<64x256xf32>
    %cst_6 = arith.constant 5.000000e-01 : f32
    %29 = vector.broadcast %cst_6 : f32 to vector<64x256xf32>
    %30 = arith.addf %28, %29 : vector<64x256xf32>
    %31 = math.floor %30 : vector<64x256xf32>
    %32 = arith.fptosi %31 : vector<64x256xf32> to vector<64x256xi32>
    %c3_i32 = arith.constant 3 : i32
    %33 = vector.broadcast %c3_i32 : i32 to vector<64x256xi32>
    %34 = arith.andi %32, %33 : vector<64x256xi32>
    %cst_7 = arith.constant 1.5703125 : f32
    %35 = vector.broadcast %cst_7 : f32 to vector<64x256xf32>
    %36 = arith.mulf %31, %35 : vector<64x256xf32>
    %37 = arith.subf %26, %36 : vector<64x256xf32>
    %cst_8 = arith.constant 4.83751297E-4 : f32
    %38 = vector.broadcast %cst_8 : f32 to vector<64x256xf32>
    %39 = arith.mulf %31, %38 : vector<64x256xf32>
    %40 = arith.subf %37, %39 : vector<64x256xf32>
    %cst_9 = arith.constant 7.549790e-08 : f32
    %41 = vector.broadcast %cst_9 : f32 to vector<64x256xf32>
    %42 = arith.mulf %31, %41 : vector<64x256xf32>
    %43 = arith.subf %40, %42 : vector<64x256xf32>
    %44 = arith.mulf %43, %43 : vector<64x256xf32>
    %45 = arith.mulf %43, %44 : vector<64x256xf32>
    %cst_10 = arith.constant -1.95152956E-4 : f32
    %46 = vector.broadcast %cst_10 : f32 to vector<64x256xf32>
    %47 = arith.mulf %44, %46 : vector<64x256xf32>
    %cst_11 = arith.constant 0.00833216123 : f32
    %48 = vector.broadcast %cst_11 : f32 to vector<64x256xf32>
    %49 = arith.addf %48, %47 : vector<64x256xf32>
    %50 = arith.mulf %44, %49 : vector<64x256xf32>
    %cst_12 = arith.constant -0.166666552 : f32
    %51 = vector.broadcast %cst_12 : f32 to vector<64x256xf32>
    %52 = arith.addf %51, %50 : vector<64x256xf32>
    %53 = arith.mulf %45, %52 : vector<64x256xf32>
    %54 = arith.addf %43, %53 : vector<64x256xf32>
    %cst_13 = arith.constant 5.000000e-01 : f32
    %55 = vector.broadcast %cst_13 : f32 to vector<64x256xf32>
    %56 = arith.mulf %55, %44 : vector<64x256xf32>
    %cst_14 = arith.constant 1.000000e+00 : f32
    %57 = vector.broadcast %cst_14 : f32 to vector<64x256xf32>
    %58 = arith.subf %57, %56 : vector<64x256xf32>
    %59 = arith.mulf %44, %44 : vector<64x256xf32>
    %cst_15 = arith.constant 2.44331568E-5 : f32
    %60 = vector.broadcast %cst_15 : f32 to vector<64x256xf32>
    %61 = arith.mulf %44, %60 : vector<64x256xf32>
    %cst_16 = arith.constant -0.00138873165 : f32
    %62 = vector.broadcast %cst_16 : f32 to vector<64x256xf32>
    %63 = arith.addf %62, %61 : vector<64x256xf32>
    %64 = arith.mulf %44, %63 : vector<64x256xf32>
    %cst_17 = arith.constant 0.0416666456 : f32
    %65 = vector.broadcast %cst_17 : f32 to vector<64x256xf32>
    %66 = arith.addf %65, %64 : vector<64x256xf32>
    %67 = arith.mulf %59, %66 : vector<64x256xf32>
    %68 = arith.addf %58, %67 : vector<64x256xf32>
    %c1_i32 = arith.constant 1 : i32
    %69 = vector.broadcast %c1_i32 : i32 to vector<64x256xi32>
    %70 = arith.andi %34, %69 : vector<64x256xi32>
    %c1_i32_18 = arith.constant 1 : i32
    %71 = vector.broadcast %c1_i32_18 : i32 to vector<64x256xi32>
    %72 = arith.cmpi eq, %70, %71 : vector<64x256xi32>
    %73 = arith.select %72, %68, %54 : vector<64x256xi1>, vector<64x256xf32>
    %74 = arith.select %72, %54, %68 : vector<64x256xi1>, vector<64x256xf32>
    %c2_i32 = arith.constant 2 : i32
    %75 = vector.broadcast %c2_i32 : i32 to vector<64x256xi32>
    %76 = arith.cmpi sge, %34, %75 : vector<64x256xi32>
    %cst_19 = arith.constant 0.000000e+00 : f32
    %77 = vector.broadcast %cst_19 : f32 to vector<64x256xf32>
    %78 = arith.subf %77, %73 : vector<64x256xf32>
    %79 = arith.select %76, %78, %73 : vector<64x256xi1>, vector<64x256xf32>
    %c1_i32_20 = arith.constant 1 : i32
    %80 = vector.broadcast %c1_i32_20 : i32 to vector<64x256xi32>
    %81 = arith.cmpi eq, %34, %80 : vector<64x256xi32>
    %c2_i32_21 = arith.constant 2 : i32
    %82 = vector.broadcast %c2_i32_21 : i32 to vector<64x256xi32>
    %83 = arith.cmpi eq, %34, %82 : vector<64x256xi32>
    %84 = arith.ori %81, %83 : vector<64x256xi1>
    %cst_22 = arith.constant 0.000000e+00 : f32
    %85 = vector.broadcast %cst_22 : f32 to vector<64x256xf32>
    %86 = arith.subf %85, %74 : vector<64x256xf32>
    %87 = arith.select %84, %86, %74 : vector<64x256xi1>, vector<64x256xf32>
    %c0_23 = arith.constant 0 : index
    %c0_24 = arith.constant 0 : index
    %88 = vector.load %arg2[%c0_23, %c0_24] : memref<128x256xf32, #tpu.memory_space<vmem>>, vector<64x256xf32>
    tpu.vector_store %arg2[%c0_23, %c0_24], %79 {strides = array<i32>} : memref<128x256xf32, #tpu.memory_space<vmem>>, vector<64x256xf32>,
    %c64 = arith.constant 64 : index
    %c0_25 = arith.constant 0 : index
    %89 = vector.load %arg2[%c64, %c0_25] : memref<128x256xf32, #tpu.memory_space<vmem>>, vector<64x256xf32>
    tpu.vector_store %arg2[%c64, %c0_25], %87 {strides = array<i32>} : memref<128x256xf32, #tpu.memory_space<vmem>>, vector<64x256xf32>,
    return
  }
  func.func @transform_0(%arg0: i32) -> (i32, i32) {
    %c0_i32 = arith.constant 0 : i32
    %c0_i32_0 = arith.constant 0 : i32
    %c0_i32_1 = arith.constant 0 : i32
    return %c0_i32, %c0_i32_0 : i32, i32
  }
  func.func @transform_1(%arg0: i32) -> (i32, i32) {
    %c0_i32 = arith.constant 0 : i32
    %c0_i32_0 = arith.constant 0 : i32
    return %c0_i32, %arg0 : i32, i32
  }
}

</mosaic_0001>

<llo_original>
// kernel: tpu_custom_call.1
$region0: #{tpu_custom_call.1}
  #allocation0 [shape = 'u32[]', space=smem, size = 0x4, offset = 0x4, fixed_abs, tag = 'smem constant byte address 0x4 - core index']
  #allocation1 [shape = 'u32[144,128]{1,0:T(1,128)}', space=vmem, size = 0x12000, scoped, tag = 'internal scratch']
  %s0 = inlined_call_operand.vmem [shape: f32[64,2], index: 0, kind: input, shape index: {}]
  %s1 = inlined_call_operand.hbm [shape: f32[128,256], index: 1, kind: output, shape index: {}]
  %s2 = sld [smem:[#allocation0]]
  $region14: #{tpu_custom_call.1} parent=0
    _
  %s4 = ssub.s32 1, %s2
  %s5 = scalar_select 0, %s4, %s2
  $region1: #{tpu_custom_call.1} parent=0
    #allocation2 [shape = 'u8[131072]{0}', space=vmem, size = 0x20000, scoped, tag = 'output window, operand 0, single buffered']
    #allocation3 [shape = 's32[1]{0}', space=sflag, size = 0x4, scoped, tag = 'scoped memory for tpu_custom_call.1']
    %6 = vsyncpa [#allocation3], 0
    // Predicated region
    $region2: #{tpu_custom_call.1} parent=1 // pred_check
      _
    $region3: #{tpu_custom_call.1} parent=1 // pred_check_branch
      %8 = sbr.rel (0) target = $region5
    $region4: #{tpu_custom_call.1} parent=1 // pred_region
      _
    $region5: #{tpu_custom_call.1} parent=1 // pred_fallthru
      _
    %v9 = vld [vmem:[%s0] sm:$0xff]
    %v10 = vld [vmem:[%s0 + $0x8] sm:$0xff]
    %v11 = vld [vmem:[%s0 + $0x10] sm:$0xff]
    %v12 = vld [vmem:[%s0 + $0x18] sm:$0xff]
    %v13 = vld [vmem:[%s0 + $0x20] sm:$0xff]
    %v14 = vld [vmem:[%s0 + $0x28] sm:$0xff]
    %v15 = vld [vmem:[%s0 + $0x30] sm:$0xff]
    %v16 = vld [vmem:[%s0 + $0x38] sm:$0xff]
    %v17 = vlaneseq
    %v18 = vand.u32 %v17, 127
    %v19 = vadd.s32 %v18, 128
    %s20 = smul.u32 0, 256
    %v21 = vstv %s20
    %v22 = vadd.s32 %v18, %v21
    %v23 = vadd.s32 %v19, %v21
    %v24 = vshra.s32 %v22, 4
    %v25 = vshra.s32 %v23, 4
    %v26 = vand.u32 %v22, 15
    %v27 = vand.u32 %v23, 15
    %v28 = vcvt.s32.f32 %v26
    %v29 = vcvt.s32.f32 %v27
    %v30 = vmul.f32 %v28, 0.125
    %v31 = vmul.f32 %v29, 0.125
    %v32 = vadd.f32 %v30, -0.9375
    %v33 = vadd.f32 %v31, -0.9375
    %v34 = vcvt.s32.f32 %v24
    %v35 = vcvt.s32.f32 %v25
    %v36 = vmul.f32 %v34, 0.125
    %v37 = vmul.f32 %v35, 0.125
    %v38 = vadd.f32 %v36, -0.9375
    %v39 = vadd.f32 %v37, -0.9375
    %41 = vset.pattern.permute.xlu0 0
    %42 = vperm.xlu0 %41, %v9
    %v43 = vpop.permute.xlu0 %42
    %46 = vset.pattern.permute.xlu0 0
    %47 = vperm.xlu0 %46, %v10
    %v48 = vpop.permute.xlu0 %47
    %51 = vset.pattern.permute.xlu0 0
    %52 = vperm.xlu0 %51, %v11
    %v53 = vpop.permute.xlu0 %52
    %56 = vset.pattern.permute.xlu0 0
    %57 = vperm.xlu0 %56, %v12
    %v58 = vpop.permute.xlu0 %57
    %61 = vset.pattern.permute.xlu0 0
    %62 = vperm.xlu0 %61, %v13
    %v63 = vpop.permute.xlu0 %62
    %66 = vset.pattern.permute.xlu0 0
    %67 = vperm.xlu0 %66, %v14
    %v68 = vpop.permute.xlu0 %67
    %71 = vset.pattern.permute.xlu0 0
    %72 = vperm.xlu0 %71, %v15
    %v73 = vpop.permute.xlu0 %72
    %76 = vset.pattern.permute.xlu0 0
    %77 = vperm.xlu0 %76, %v16
    %v78 = vpop.permute.xlu0 %77
    %v80 = vmul.f32 %v43, %v32
    %v81 = vmul.f32 %v43, %v33
    %v82 = vmul.f32 %v48, %v32
    %v83 = vmul.f32 %v48, %v33
    %v84 = vmul.f32 %v53, %v32
    %v85 = vmul.f32 %v53, %v33
    %v86 = vmul.f32 %v58, %v32
    %v87 = vmul.f32 %v58, %v33
    %v88 = vmul.f32 %v63, %v32
    %v89 = vmul.f32 %v63, %v33
    %v90 = vmul.f32 %v68, %v32
    %v91 = vmul.f32 %v68, %v33
    %v92 = vmul.f32 %v73, %v32
    %v93 = vmul.f32 %v73, %v33
    %v94 = vmul.f32 %v78, %v32
    %v95 = vmul.f32 %v78, %v33
    %96 = vset.pattern.permute.xlu0 1
    %97 = vperm.xlu0 %96, %v9
    %v98 = vpop.permute.xlu0 %97
    %100 = vset.pattern.permute.xlu0 1
    %101 = vperm.xlu0 %100, %v10
    %v102 = vpop.permute.xlu0 %101
    %104 = vset.pattern.permute.xlu0 1
    %105 = vperm.xlu0 %104, %v11
    %v106 = vpop.permute.xlu0 %105
    %108 = vset.pattern.permute.xlu0 1
    %109 = vperm.xlu0 %108, %v12
    %v110 = vpop.permute.xlu0 %109
    %112 = vset.pattern.permute.xlu0 1
    %113 = vperm.xlu0 %112, %v13
    %v114 = vpop.permute.xlu0 %113
    %116 = vset.pattern.permute.xlu0 1
    %117 = vperm.xlu0 %116, %v14
    %v118 = vpop.permute.xlu0 %117
    %120 = vset.pattern.permute.xlu0 1
    %121 = vperm.xlu0 %120, %v15
    %v122 = vpop.permute.xlu0 %121
    %124 = vset.pattern.permute.xlu0 1
    %125 = vperm.xlu0 %124, %v16
    %v126 = vpop.permute.xlu0 %125
    %v128 = vmul.f32 %v98, %v38
    %v129 = vmul.f32 %v98, %v39
    %v130 = vmul.f32 %v102, %v38
    %v131 = vmul.f32 %v102, %v39
    %v132 = vmul.f32 %v106, %v38
    %v133 = vmul.f32 %v106, %v39
    %v134 = vmul.f32 %v110, %v38
    %v135 = vmul.f32 %v110, %v39
    %v136 = vmul.f32 %v114, %v38
    %v137 = vmul.f32 %v114, %v39
    %v138 = vmul.f32 %v118, %v38
    %v139 = vmul.f32 %v118, %v39
    %v140 = vmul.f32 %v122, %v38
    %v141 = vmul.f32 %v122, %v39
    %v142 = vmul.f32 %v126, %v38
    %v143 = vmul.f32 %v126, %v39
    %v144 = vadd.f32 %v80, %v128
    %v145 = vadd.f32 %v81, %v129
    %v146 = vadd.f32 %v82, %v130
    %v147 = vadd.f32 %v83, %v131
    %v148 = vadd.f32 %v84, %v132
    %v149 = vadd.f32 %v85, %v133
    %v150 = vadd.f32 %v86, %v134
    %v151 = vadd.f32 %v87, %v135
    %v152 = vadd.f32 %v88, %v136
    %v153 = vadd.f32 %v89, %v137
    %v154 = vadd.f32 %v90, %v138
    %v155 = vadd.f32 %v91, %v139
    %v156 = vadd.f32 %v92, %v140
    %v157 = vadd.f32 %v93, %v141
    %v158 = vadd.f32 %v94, %v142
    %v159 = vadd.f32 %v95, %v143
    %v160 = vmul.f32 %v144, 0.63661975
    %v161 = vmul.f32 %v145, 0.63661975
    %v162 = vmul.f32 %v146, 0.63661975
    %v163 = vmul.f32 %v147, 0.63661975
    %v164 = vmul.f32 %v148, 0.63661975
    %v165 = vmul.f32 %v149, 0.63661975
    %v166 = vmul.f32 %v150, 0.63661975
    %v167 = vmul.f32 %v151, 0.63661975
    %v168 = vmul.f32 %v152, 0.63661975
    %v169 = vmul.f32 %v153, 0.63661975
    %v170 = vmul.f32 %v154, 0.63661975
    %v171 = vmul.f32 %v155, 0.63661975
    %v172 = vmul.f32 %v156, 0.63661975
    %v173 = vmul.f32 %v157, 0.63661975
    %v174 = vmul.f32 %v158, 0.63661975
    %v175 = vmul.f32 %v159, 0.63661975
    %v176 = vadd.f32 %v160, 0.5
    %v177 = vadd.f32 %v161, 0.5
    %v178 = vadd.f32 %v162, 0.5
    %v179 = vadd.f32 %v163, 0.5
    %v180 = vadd.f32 %v164, 0.5
    %v181 = vadd.f32 %v165, 0.5
    %v182 = vadd.f32 %v166, 0.5
    %v183 = vadd.f32 %v167, 0.5
    %v184 = vadd.f32 %v168, 0.5
    %v185 = vadd.f32 %v169, 0.5
    %v186 = vadd.f32 %v170, 0.5
    %v187 = vadd.f32 %v171, 0.5
    %v188 = vadd.f32 %v172, 0.5
    %v189 = vadd.f32 %v173, 0.5
    %v190 = vadd.f32 %v174, 0.5
    %v191 = vadd.f32 %v175, 0.5
    %v192 = vfloor.f32 %v176
    %v193 = vfloor.f32 %v177
    %v194 = vfloor.f32 %v178
    %v195 = vfloor.f32 %v179
    %v196 = vfloor.f32 %v180
    %v197 = vfloor.f32 %v181
    %v198 = vfloor.f32 %v182
    %v199 = vfloor.f32 %v183
    %v200 = vfloor.f32 %v184
    %v201 = vfloor.f32 %v185
    %v202 = vfloor.f32 %v186
    %v203 = vfloor.f32 %v187
    %v204 = vfloor.f32 %v188
    %v205 = vfloor.f32 %v189
    %v206 = vfloor.f32 %v190
    %v207 = vfloor.f32 %v191
    %v208 = vcvt.f32.s32.to.zero.pseudo %v192
    %v209 = vcvt.f32.s32.to.zero.pseudo %v193
    %v210 = vcvt.f32.s32.to.zero.pseudo %v194
    %v211 = vcvt.f32.s32.to.zero.pseudo %v195
    %v212 = vcvt.f32.s32.to.zero.pseudo %v196
    %v213 = vcvt.f32.s32.to.zero.pseudo %v197
    %v214 = vcvt.f32.s32.to.zero.pseudo %v198
    %v215 = vcvt.f32.s32.to.zero.pseudo %v199
    %v216 = vcvt.f32.s32.to.zero.pseudo %v200
    %v217 = vcvt.f32.s32.to.zero.pseudo %v201
    %v218 = vcvt.f32.s32.to.zero.pseudo %v202
    %v219 = vcvt.f32.s32.to.zero.pseudo %v203
    %v220 = vcvt.f32.s32.to.zero.pseudo %v204
    %v221 = vcvt.f32.s32.to.zero.pseudo %v205
    %v222 = vcvt.f32.s32.to.zero.pseudo %v206
    %v223 = vcvt.f32.s32.to.zero.pseudo %v207
    %v224 = vand.u32 %v208, 3
    %v225 = vand.u32 %v209, 3
    %v226 = vand.u32 %v210, 3
    %v227 = vand.u32 %v211, 3
    %v228 = vand.u32 %v212, 3
    %v229 = vand.u32 %v213, 3
    %v230 = vand.u32 %v214, 3
    %v231 = vand.u32 %v215, 3
    %v232 = vand.u32 %v216, 3
    %v233 = vand.u32 %v217, 3
    %v234 = vand.u32 %v218, 3
    %v235 = vand.u32 %v219, 3
    %v236 = vand.u32 %v220, 3
    %v237 = vand.u32 %v221, 3
    %v238 = vand.u32 %v222, 3
    %v239 = vand.u32 %v223, 3
    %v240 = vmul.f32 %v192, 1.5703125
    %v241 = vmul.f32 %v193, 1.5703125
    %v242 = vmul.f32 %v194, 1.5703125
    %v243 = vmul.f32 %v195, 1.5703125
    %v244 = vmul.f32 %v196, 1.5703125
    %v245 = vmul.f32 %v197, 1.5703125
    %v246 = vmul.f32 %v198, 1.5703125
    %v247 = vmul.f32 %v199, 1.5703125
    %v248 = vmul.f32 %v200, 1.5703125
    %v249 = vmul.f32 %v201, 1.5703125
    %v250 = vmul.f32 %v202, 1.5703125
    %v251 = vmul.f32 %v203, 1.5703125
    %v252 = vmul.f32 %v204, 1.5703125
    %v253 = vmul.f32 %v205, 1.5703125
    %v254 = vmul.f32 %v206, 1.5703125
    %v255 = vmul.f32 %v207, 1.5703125
    %v256 = vsub.f32 %v144, %v240
    %v257 = vsub.f32 %v145, %v241
    %v258 = vsub.f32 %v146, %v242
    %v259 = vsub.f32 %v147, %v243
    %v260 = vsub.f32 %v148, %v244
    %v261 = vsub.f32 %v149, %v245
    %v262 = vsub.f32 %v150, %v246
    %v263 = vsub.f32 %v151, %v247
    %v264 = vsub.f32 %v152, %v248
    %v265 = vsub.f32 %v153, %v249
    %v266 = vsub.f32 %v154, %v250
    %v267 = vsub.f32 %v155, %v251
    %v268 = vsub.f32 %v156, %v252
    %v269 = vsub.f32 %v157, %v253
    %v270 = vsub.f32 %v158, %v254
    %v271 = vsub.f32 %v159, %v255
    %v272 = vmul.f32 %v192, 0.0004837513
    %v273 = vmul.f32 %v193, 0.0004837513
    %v274 = vmul.f32 %v194, 0.0004837513
    %v275 = vmul.f32 %v195, 0.0004837513
    %v276 = vmul.f32 %v196, 0.0004837513
    %v277 = vmul.f32 %v197, 0.0004837513
    %v278 = vmul.f32 %v198, 0.0004837513
    %v279 = vmul.f32 %v199, 0.0004837513
    %v280 = vmul.f32 %v200, 0.0004837513
    %v281 = vmul.f32 %v201, 0.0004837513
    %v282 = vmul.f32 %v202, 0.0004837513
    %v283 = vmul.f32 %v203, 0.0004837513
    %v284 = vmul.f32 %v204, 0.0004837513
    %v285 = vmul.f32 %v205, 0.0004837513
    %v286 = vmul.f32 %v206, 0.0004837513
    %v287 = vmul.f32 %v207, 0.0004837513
    %v288 = vsub.f32 %v256, %v272
    %v289 = vsub.f32 %v257, %v273
    %v290 = vsub.f32 %v258, %v274
    %v291 = vsub.f32 %v259, %v275
    %v292 = vsub.f32 %v260, %v276
    %v293 = vsub.f32 %v261, %v277
    %v294 = vsub.f32 %v262, %v278
    %v295 = vsub.f32 %v263, %v279
    %v296 = vsub.f32 %v264, %v280
    %v297 = vsub.f32 %v265, %v281
    %v298 = vsub.f32 %v266, %v282
    %v299 = vsub.f32 %v267, %v283
    %v300 = vsub.f32 %v268, %v284
    %v301 = vsub.f32 %v269, %v285
    %v302 = vsub.f32 %v270, %v286
    %v303 = vsub.f32 %v271, %v287
    %v304 = vmul.f32 %v192, 7.54979e-08
    %v305 = vmul.f32 %v193, 7.54979e-08
    %v306 = vmul.f32 %v194, 7.54979e-08
    %v307 = vmul.f32 %v195, 7.54979e-08
    %v308 = vmul.f32 %v196, 7.54979e-08
    %v309 = vmul.f32 %v197, 7.54979e-08
    %v310 = vmul.f32 %v198, 7.54979e-08
    %v311 = vmul.f32 %v199, 7.54979e-08
    %v312 = vmul.f32 %v200, 7.54979e-08
    %v313 = vmul.f32 %v201, 7.54979e-08
    %v314 = vmul.f32 %v202, 7.54979e-08
    %v315 = vmul.f32 %v203, 7.54979e-08
    %v316 = vmul.f32 %v204, 7.54979e-08
    %v317 = vmul.f32 %v205, 7.54979e-08
    %v318 = vmul.f32 %v206, 7.54979e-08
    %v319 = vmul.f32 %v207, 7.54979e-08
    %v320 = vsub.f32 %v288, %v304
    %v321 = vsub.f32 %v289, %v305
    %v322 = vsub.f32 %v290, %v306
    %v323 = vsub.f32 %v291, %v307
    %v324 = vsub.f32 %v292, %v308
    %v325 = vsub.f32 %v293, %v309
    %v326 = vsub.f32 %v294, %v310
    %v327 = vsub.f32 %v295, %v311
    %v328 = vsub.f32 %v296, %v312
    %v329 = vsub.f32 %v297, %v313
    %v330 = vsub.f32 %v298, %v314
    %v331 = vsub.f32 %v299, %v315
    %v332 = vsub.f32 %v300, %v316
    %v333 = vsub.f32 %v301, %v317
    %v334 = vsub.f32 %v302, %v318
    %v335 = vsub.f32 %v303, %v319
    %v336 = vmul.f32 %v320, %v320
    %v337 = vmul.f32 %v321, %v321
    %v338 = vmul.f32 %v322, %v322
    %v339 = vmul.f32 %v323, %v323
    %v340 = vmul.f32 %v324, %v324
    %v341 = vmul.f32 %v325, %v325
    %v342 = vmul.f32 %v326, %v326
    %v343 = vmul.f32 %v327, %v327
    %v344 = vmul.f32 %v328, %v328
    %v345 = vmul.f32 %v329, %v329
    %v346 = vmul.f32 %v330, %v330
    %v347 = vmul.f32 %v331, %v331
    %v348 = vmul.f32 %v332, %v332
    %v349 = vmul.f32 %v333, %v333
    %v350 = vmul.f32 %v334, %v334
    %v351 = vmul.f32 %v335, %v335
    %v352 = vmul.f32 %v320, %v336
    %v353 = vmul.f32 %v321, %v337
    %v354 = vmul.f32 %v322, %v338
    %v355 = vmul.f32 %v323, %v339
    %v356 = vmul.f32 %v324, %v340
    %v357 = vmul.f32 %v325, %v341
    %v358 = vmul.f32 %v326, %v342
    %v359 = vmul.f32 %v327, %v343
    %v360 = vmul.f32 %v328, %v344
    %v361 = vmul.f32 %v329, %v345
    %v362 = vmul.f32 %v330, %v346
    %v363 = vmul.f32 %v331, %v347
    %v364 = vmul.f32 %v332, %v348
    %v365 = vmul.f32 %v333, %v349
    %v366 = vmul.f32 %v334, %v350
    %v367 = vmul.f32 %v335, %v351
    %v368 = vmul.f32 %v336, -0.00019515296
    %v369 = vmul.f32 %v337, -0.00019515296
    %v370 = vmul.f32 %v338, -0.00019515296
    %v371 = vmul.f32 %v339, -0.00019515296
    %v372 = vmul.f32 %v340, -0.00019515296
    %v373 = vmul.f32 %v341, -0.00019515296
    %v374 = vmul.f32 %v342, -0.00019515296
    %v375 = vmul.f32 %v343, -0.00019515296
    %v376 = vmul.f32 %v344, -0.00019515296
    %v377 = vmul.f32 %v345, -0.00019515296
    %v378 = vmul.f32 %v346, -0.00019515296
    %v379 = vmul.f32 %v347, -0.00019515296
    %v380 = vmul.f32 %v348, -0.00019515296
    %v381 = vmul.f32 %v349, -0.00019515296
    %v382 = vmul.f32 %v350, -0.00019515296
    %v383 = vmul.f32 %v351, -0.00019515296
    %v384 = vadd.f32 %v368, 0.008332161
    %v385 = vadd.f32 %v369, 0.008332161
    %v386 = vadd.f32 %v370, 0.008332161
    %v387 = vadd.f32 %v371, 0.008332161
    %v388 = vadd.f32 %v372, 0.008332161
    %v389 = vadd.f32 %v373, 0.008332161
    %v390 = vadd.f32 %v374, 0.008332161
    %v391 = vadd.f32 %v375, 0.008332161
    %v392 = vadd.f32 %v376, 0.008332161
    %v393 = vadd.f32 %v377, 0.008332161
    %v394 = vadd.f32 %v378, 0.008332161
    %v395 = vadd.f32 %v379, 0.008332161
    %v396 = vadd.f32 %v380, 0.008332161
    %v397 = vadd.f32 %v381, 0.008332161
    %v398 = vadd.f32 %v382, 0.008332161
    %v399 = vadd.f32 %v383, 0.008332161
    %v400 = vmul.f32 %v336, %v384
    %v401 = vmul.f32 %v337, %v385
    %v402 = vmul.f32 %v338, %v386
    %v403 = vmul.f32 %v339, %v387
    %v404 = vmul.f32 %v340, %v388
    %v405 = vmul.f32 %v341, %v389
    %v406 = vmul.f32 %v342, %v390
    %v407 = vmul.f32 %v343, %v391
    %v408 = vmul.f32 %v344, %v392
    %v409 = vmul.f32 %v345, %v393
    %v410 = vmul.f32 %v346, %v394
    %v411 = vmul.f32 %v347, %v395
    %v412 = vmul.f32 %v348, %v396
    %v413 = vmul.f32 %v349, %v397
    %v414 = vmul.f32 %v350, %v398
    %v415 = vmul.f32 %v351, %v399
    %v416 = vadd.f32 %v400, -0.16666655
    %v417 = vadd.f32 %v401, -0.16666655
    %v418 = vadd.f32 %v402, -0.16666655
    %v419 = vadd.f32 %v403, -0.16666655
    %v420 = vadd.f32 %v404, -0.16666655
    %v421 = vadd.f32 %v405, -0.16666655
    %v422 = vadd.f32 %v406, -0.16666655
    %v423 = vadd.f32 %v407, -0.16666655
    %v424 = vadd.f32 %v408, -0.16666655
    %v425 = vadd.f32 %v409, -0.16666655
    %v426 = vadd.f32 %v410, -0.16666655
    %v427 = vadd.f32 %v411, -0.16666655
    %v428 = vadd.f32 %v412, -0.16666655
    %v429 = vadd.f32 %v413, -0.16666655
    %v430 = vadd.f32 %v414, -0.16666655
    %v431 = vadd.f32 %v415, -0.16666655
    %v432 = vmul.f32 %v352, %v416
    %v433 = vmul.f32 %v353, %v417
    %v434 = vmul.f32 %v354, %v418
    %v435 = vmul.f32 %v355, %v419
    %v436 = vmul.f32 %v356, %v420
    %v437 = vmul.f32 %v357, %v421
    %v438 = vmul.f32 %v358, %v422
    %v439 = vmul.f32 %v359, %v423
    %v440 = vmul.f32 %v360, %v424
    %v441 = vmul.f32 %v361, %v425
    %v442 = vmul.f32 %v362, %v426
    %v443 = vmul.f32 %v363, %v427
    %v444 = vmul.f32 %v364, %v428
    %v445 = vmul.f32 %v365, %v429
    %v446 = vmul.f32 %v366, %v430
    %v447 = vmul.f32 %v367, %v431
    %v448 = vadd.f32 %v320, %v432
    %v449 = vadd.f32 %v321, %v433
    %v450 = vadd.f32 %v322, %v434
    %v451 = vadd.f32 %v323, %v435
    %v452 = vadd.f32 %v324, %v436
    %v453 = vadd.f32 %v325, %v437
    %v454 = vadd.f32 %v326, %v438
    %v455 = vadd.f32 %v327, %v439
    %v456 = vadd.f32 %v328, %v440
    %v457 = vadd.f32 %v329, %v441
    %v458 = vadd.f32 %v330, %v442
    %v459 = vadd.f32 %v331, %v443
    %v460 = vadd.f32 %v332, %v444
    %v461 = vadd.f32 %v333, %v445
    %v462 = vadd.f32 %v334, %v446
    %v463 = vadd.f32 %v335, %v447
    %v464 = vmul.f32 %v336, 0.5
    %v465 = vmul.f32 %v337, 0.5
    %v466 = vmul.f32 %v338, 0.5
    %v467 = vmul.f32 %v339, 0.5
    %v468 = vmul.f32 %v340, 0.5
    %v469 = vmul.f32 %v341, 0.5
    %v470 = vmul.f32 %v342, 0.5
    %v471 = vmul.f32 %v343, 0.5
    %v472 = vmul.f32 %v344, 0.5
    %v473 = vmul.f32 %v345, 0.5
    %v474 = vmul.f32 %v346, 0.5
    %v475 = vmul.f32 %v347, 0.5
    %v476 = vmul.f32 %v348, 0.5
    %v477 = vmul.f32 %v349, 0.5
    %v478 = vmul.f32 %v350, 0.5
    %v479 = vmul.f32 %v351, 0.5
    %v480 = vsub.f32 1.0, %v464
    %v481 = vsub.f32 1.0, %v465
    %v482 = vsub.f32 1.0, %v466
    %v483 = vsub.f32 1.0, %v467
    %v484 = vsub.f32 1.0, %v468
    %v485 = vsub.f32 1.0, %v469
    %v486 = vsub.f32 1.0, %v470
    %v487 = vsub.f32 1.0, %v471
    %v488 = vsub.f32 1.0, %v472
    %v489 = vsub.f32 1.0, %v473
    %v490 = vsub.f32 1.0, %v474
    %v491 = vsub.f32 1.0, %v475
    %v492 = vsub.f32 1.0, %v476
    %v493 = vsub.f32 1.0, %v477
    %v494 = vsub.f32 1.0, %v478
    %v495 = vsub.f32 1.0, %v479
    %v496 = vmul.f32 %v336, %v336
    %v497 = vmul.f32 %v337, %v337
    %v498 = vmul.f32 %v338, %v338
    %v499 = vmul.f32 %v339, %v339
    %v500 = vmul.f32 %v340, %v340
    %v501 = vmul.f32 %v341, %v341
    %v502 = vmul.f32 %v342, %v342
    %v503 = vmul.f32 %v343, %v343
    %v504 = vmul.f32 %v344, %v344
    %v505 = vmul.f32 %v345, %v345
    %v506 = vmul.f32 %v346, %v346
    %v507 = vmul.f32 %v347, %v347
    %v508 = vmul.f32 %v348, %v348
    %v509 = vmul.f32 %v349, %v349
    %v510 = vmul.f32 %v350, %v350
    %v511 = vmul.f32 %v351, %v351
    %v512 = vmul.f32 %v336, 2.4433157e-05
    %v513 = vmul.f32 %v337, 2.4433157e-05
    %v514 = vmul.f32 %v338, 2.4433157e-05
    %v515 = vmul.f32 %v339, 2.4433157e-05
    %v516 = vmul.f32 %v340, 2.4433157e-05
    %v517 = vmul.f32 %v341, 2.4433157e-05
    %v518 = vmul.f32 %v342, 2.4433157e-05
    %v519 = vmul.f32 %v343, 2.4433157e-05
    %v520 = vmul.f32 %v344, 2.4433157e-05
    %v521 = vmul.f32 %v345, 2.4433157e-05
    %v522 = vmul.f32 %v346, 2.4433157e-05
    %v523 = vmul.f32 %v347, 2.4433157e-05
    %v524 = vmul.f32 %v348, 2.4433157e-05
    %v525 = vmul.f32 %v349, 2.4433157e-05
    %v526 = vmul.f32 %v350, 2.4433157e-05
    %v527 = vmul.f32 %v351, 2.4433157e-05
    %v528 = vadd.f32 %v512, -0.0013887316
    %v529 = vadd.f32 %v513, -0.0013887316
    %v530 = vadd.f32 %v514, -0.0013887316
    %v531 = vadd.f32 %v515, -0.0013887316
    %v532 = vadd.f32 %v516, -0.0013887316
    %v533 = vadd.f32 %v517, -0.0013887316
    %v534 = vadd.f32 %v518, -0.0013887316
    %v535 = vadd.f32 %v519, -0.0013887316
    %v536 = vadd.f32 %v520, -0.0013887316
    %v537 = vadd.f32 %v521, -0.0013887316
    %v538 = vadd.f32 %v522, -0.0013887316
    %v539 = vadd.f32 %v523, -0.0013887316
    %v540 = vadd.f32 %v524, -0.0013887316
    %v541 = vadd.f32 %v525, -0.0013887316
    %v542 = vadd.f32 %v526, -0.0013887316
    %v543 = vadd.f32 %v527, -0.0013887316
    %v544 = vmul.f32 %v336, %v528
    %v545 = vmul.f32 %v337, %v529
    %v546 = vmul.f32 %v338, %v530
    %v547 = vmul.f32 %v339, %v531
    %v548 = vmul.f32 %v340, %v532
    %v549 = vmul.f32 %v341, %v533
    %v550 = vmul.f32 %v342, %v534
    %v551 = vmul.f32 %v343, %v535
    %v552 = vmul.f32 %v344, %v536
    %v553 = vmul.f32 %v345, %v537
    %v554 = vmul.f32 %v346, %v538
    %v555 = vmul.f32 %v347, %v539
    %v556 = vmul.f32 %v348, %v540
    %v557 = vmul.f32 %v349, %v541
    %v558 = vmul.f32 %v350, %v542
    %v559 = vmul.f32 %v351, %v543
    %v560 = vadd.f32 %v544, 0.041666646
    %v561 = vadd.f32 %v545, 0.041666646
    %v562 = vadd.f32 %v546, 0.041666646
    %v563 = vadd.f32 %v547, 0.041666646
    %v564 = vadd.f32 %v548, 0.041666646
    %v565 = vadd.f32 %v549, 0.041666646
    %v566 = vadd.f32 %v550, 0.041666646
    %v567 = vadd.f32 %v551, 0.041666646
    %v568 = vadd.f32 %v552, 0.041666646
    %v569 = vadd.f32 %v553, 0.041666646
    %v570 = vadd.f32 %v554, 0.041666646
    %v571 = vadd.f32 %v555, 0.041666646
    %v572 = vadd.f32 %v556, 0.041666646
    %v573 = vadd.f32 %v557, 0.041666646
    %v574 = vadd.f32 %v558, 0.041666646
    %v575 = vadd.f32 %v559, 0.041666646
    %v576 = vmul.f32 %v496, %v560
    %v577 = vmul.f32 %v497, %v561
    %v578 = vmul.f32 %v498, %v562
    %v579 = vmul.f32 %v499, %v563
    %v580 = vmul.f32 %v500, %v564
    %v581 = vmul.f32 %v501, %v565
    %v582 = vmul.f32 %v502, %v566
    %v583 = vmul.f32 %v503, %v567
    %v584 = vmul.f32 %v504, %v568
    %v585 = vmul.f32 %v505, %v569
    %v586 = vmul.f32 %v506, %v570
    %v587 = vmul.f32 %v507, %v571
    %v588 = vmul.f32 %v508, %v572
    %v589 = vmul.f32 %v509, %v573
    %v590 = vmul.f32 %v510, %v574
    %v591 = vmul.f32 %v511, %v575
    %v592 = vadd.f32 %v480, %v576
    %v593 = vadd.f32 %v481, %v577
    %v594 = vadd.f32 %v482, %v578
    %v595 = vadd.f32 %v483, %v579
    %v596 = vadd.f32 %v484, %v580
    %v597 = vadd.f32 %v485, %v581
    %v598 = vadd.f32 %v486, %v582
    %v599 = vadd.f32 %v487, %v583
    %v600 = vadd.f32 %v488, %v584
    %v601 = vadd.f32 %v489, %v585
    %v602 = vadd.f32 %v490, %v586
    %v603 = vadd.f32 %v491, %v587
    %v604 = vadd.f32 %v492, %v588
    %v605 = vadd.f32 %v493, %v589
    %v606 = vadd.f32 %v494, %v590
    %v607 = vadd.f32 %v495, %v591
    %v608 = vand.u32 %v224, 1
    %v609 = vand.u32 %v225, 1
    %v610 = vand.u32 %v226, 1
    %v611 = vand.u32 %v227, 1
    %v612 = vand.u32 %v228, 1
    %v613 = vand.u32 %v229, 1
    %v614 = vand.u32 %v230, 1
    %v615 = vand.u32 %v231, 1
    %v616 = vand.u32 %v232, 1
    %v617 = vand.u32 %v233, 1
    %v618 = vand.u32 %v234, 1
    %v619 = vand.u32 %v235, 1
    %v620 = vand.u32 %v236, 1
    %v621 = vand.u32 %v237, 1
    %v622 = vand.u32 %v238, 1
    %v623 = vand.u32 %v239, 1
    %vm624 = vcmp.eq.s32.totalorder %v608, 1
    %vm625 = vcmp.eq.s32.totalorder %v609, 1
    %vm626 = vcmp.eq.s32.totalorder %v610, 1
    %vm627 = vcmp.eq.s32.totalorder %v611, 1
    %vm628 = vcmp.eq.s32.totalorder %v612, 1
    %vm629 = vcmp.eq.s32.totalorder %v613, 1
    %vm630 = vcmp.eq.s32.totalorder %v614, 1
    %vm631 = vcmp.eq.s32.totalorder %v615, 1
    %vm632 = vcmp.eq.s32.totalorder %v616, 1
    %vm633 = vcmp.eq.s32.totalorder %v617, 1
    %vm634 = vcmp.eq.s32.totalorder %v618, 1
    %vm635 = vcmp.eq.s32.totalorder %v619, 1
    %vm636 = vcmp.eq.s32.totalorder %v620, 1
    %vm637 = vcmp.eq.s32.totalorder %v621, 1
    %vm638 = vcmp.eq.s32.totalorder %v622, 1
    %vm639 = vcmp.eq.s32.totalorder %v623, 1
    %v640 = vsel %vm624, %v592, %v448
    %v641 = vsel %vm625, %v593, %v449
    %v642 = vsel %vm626, %v594, %v450
    %v643 = vsel %vm627, %v595, %v451
    %v644 = vsel %vm628, %v596, %v452
    %v645 = vsel %vm629, %v597, %v453
    %v646 = vsel %vm630, %v598, %v454
    %v647 = vsel %vm631, %v599, %v455
    %v648 = vsel %vm632, %v600, %v456
    %v649 = vsel %vm633, %v601, %v457
    %v650 = vsel %vm634, %v602, %v458
    %v651 = vsel %vm635, %v603, %v459
    %v652 = vsel %vm636, %v604, %v460
    %v653 = vsel %vm637, %v605, %v461
    %v654 = vsel %vm638, %v606, %v462
    %v655 = vsel %vm639, %v607, %v463
    %v656 = vsel %vm624, %v448, %v592
    %v657 = vsel %vm625, %v449, %v593
    %v658 = vsel %vm626, %v450, %v594
    %v659 = vsel %vm627, %v451, %v595
    %v660 = vsel %vm628, %v452, %v596
    %v661 = vsel %vm629, %v453, %v597
    %v662 = vsel %vm630, %v454, %v598
    %v663 = vsel %vm631, %v455, %v599
    %v664 = vsel %vm632, %v456, %v600
    %v665 = vsel %vm633, %v457, %v601
    %v666 = vsel %vm634, %v458, %v602
    %v667 = vsel %vm635, %v459, %v603
    %v668 = vsel %vm636, %v460, %v604
    %v669 = vsel %vm637, %v461, %v605
    %v670 = vsel %vm638, %v462, %v606
    %v671 = vsel %vm639, %v463, %v607
    %vm672 = vcmp.ge.s32.totalorder %v224, 2
    %vm673 = vcmp.ge.s32.totalorder %v225, 2
    %vm674 = vcmp.ge.s32.totalorder %v226, 2
    %vm675 = vcmp.ge.s32.totalorder %v227, 2
    %vm676 = vcmp.ge.s32.totalorder %v228, 2
    %vm677 = vcmp.ge.s32.totalorder %v229, 2
    %vm678 = vcmp.ge.s32.totalorder %v230, 2
    %vm679 = vcmp.ge.s32.totalorder %v231, 2
    %vm680 = vcmp.ge.s32.totalorder %v232, 2
    %vm681 = vcmp.ge.s32.totalorder %v233, 2
    %vm682 = vcmp.ge.s32.totalorder %v234, 2
    %vm683 = vcmp.ge.s32.totalorder %v235, 2
    %vm684 = vcmp.ge.s32.totalorder %v236, 2
    %vm685 = vcmp.ge.s32.totalorder %v237, 2
    %vm686 = vcmp.ge.s32.totalorder %v238, 2
    %vm687 = vcmp.ge.s32.totalorder %v239, 2
    %v688 = vsub.f32 0.0, %v640
    %v689 = vsub.f32 0.0, %v641
    %v690 = vsub.f32 0.0, %v642
    %v691 = vsub.f32 0.0, %v643
    %v692 = vsub.f32 0.0, %v644
    %v693 = vsub.f32 0.0, %v645
    %v694 = vsub.f32 0.0, %v646
    %v695 = vsub.f32 0.0, %v647
    %v696 = vsub.f32 0.0, %v648
    %v697 = vsub.f32 0.0, %v649
    %v698 = vsub.f32 0.0, %v650
    %v699 = vsub.f32 0.0, %v651
    %v700 = vsub.f32 0.0, %v652
    %v701 = vsub.f32 0.0, %v653
    %v702 = vsub.f32 0.0, %v654
    %v703 = vsub.f32 0.0, %v655
    %v704 = vsel %vm672, %v688, %v640
    %v705 = vsel %vm673, %v689, %v641
    %v706 = vsel %vm674, %v690, %v642
    %v707 = vsel %vm675, %v691, %v643
    %v708 = vsel %vm676, %v692, %v644
    %v709 = vsel %vm677, %v693, %v645
    %v710 = vsel %vm678, %v694, %v646
    %v711 = vsel %vm679, %v695, %v647
    %v712 = vsel %vm680, %v696, %v648
    %v713 = vsel %vm681, %v697, %v649
    %v714 = vsel %vm682, %v698, %v650
    %v715 = vsel %vm683, %v699, %v651
    %v716 = vsel %vm684, %v700, %v652
    %v717 = vsel %vm685, %v701, %v653
    %v718 = vsel %vm686, %v702, %v654
    %v719 = vsel %vm687, %v703, %v655
    %vm720 = vcmp.eq.s32.totalorder %v224, 1
    %vm721 = vcmp.eq.s32.totalorder %v225, 1
    %vm722 = vcmp.eq.s32.totalorder %v226, 1
    %vm723 = vcmp.eq.s32.totalorder %v227, 1
    %vm724 = vcmp.eq.s32.totalorder %v228, 1
    %vm725 = vcmp.eq.s32.totalorder %v229, 1
    %vm726 = vcmp.eq.s32.totalorder %v230, 1
    %vm727 = vcmp.eq.s32.totalorder %v231, 1
    %vm728 = vcmp.eq.s32.totalorder %v232, 1
    %vm729 = vcmp.eq.s32.totalorder %v233, 1
    %vm730 = vcmp.eq.s32.totalorder %v234, 1
    %vm731 = vcmp.eq.s32.totalorder %v235, 1
    %vm732 = vcmp.eq.s32.totalorder %v236, 1
    %vm733 = vcmp.eq.s32.totalorder %v237, 1
    %vm734 = vcmp.eq.s32.totalorder %v238, 1
    %vm735 = vcmp.eq.s32.totalorder %v239, 1
    %vm736 = vcmp.eq.s32.totalorder %v224, 2
    %vm737 = vcmp.eq.s32.totalorder %v225, 2
    %vm738 = vcmp.eq.s32.totalorder %v226, 2
    %vm739 = vcmp.eq.s32.totalorder %v227, 2
    %vm740 = vcmp.eq.s32.totalorder %v228, 2
    %vm741 = vcmp.eq.s32.totalorder %v229, 2
    %vm742 = vcmp.eq.s32.totalorder %v230, 2
    %vm743 = vcmp.eq.s32.totalorder %v231, 2
    %vm744 = vcmp.eq.s32.totalorder %v232, 2
    %vm745 = vcmp.eq.s32.totalorder %v233, 2
    %vm746 = vcmp.eq.s32.totalorder %v234, 2
    %vm747 = vcmp.eq.s32.totalorder %v235, 2
    %vm748 = vcmp.eq.s32.totalorder %v236, 2
    %vm749 = vcmp.eq.s32.totalorder %v237, 2
    %vm750 = vcmp.eq.s32.totalorder %v238, 2
    %vm751 = vcmp.eq.s32.totalorder %v239, 2
    %vm752 = vmor %vm720, %vm736
    %vm753 = vmor %vm721, %vm737
    %vm754 = vmor %vm722, %vm738
    %vm755 = vmor %vm723, %vm739
    %vm756 = vmor %vm724, %vm740
    %vm757 = vmor %vm725, %vm741
    %vm758 = vmor %vm726, %vm742
    %vm759 = vmor %vm727, %vm743
    %vm760 = vmor %vm728, %vm744
    %vm761 = vmor %vm729, %vm745
    %vm762 = vmor %vm730, %vm746
    %vm763 = vmor %vm731, %vm747
    %vm764 = vmor %vm732, %vm748
    %vm765 = vmor %vm733, %vm749
    %vm766 = vmor %vm734, %vm750
    %vm767 = vmor %vm735, %vm751
    %v768 = vsub.f32 0.0, %v656
    %v769 = vsub.f32 0.0, %v657
    %v770 = vsub.f32 0.0, %v658
    %v771 = vsub.f32 0.0, %v659
    %v772 = vsub.f32 0.0, %v660
    %v773 = vsub.f32 0.0, %v661
    %v774 = vsub.f32 0.0, %v662
    %v775 = vsub.f32 0.0, %v663
    %v776 = vsub.f32 0.0, %v664
    %v777 = vsub.f32 0.0, %v665
    %v778 = vsub.f32 0.0, %v666
    %v779 = vsub.f32 0.0, %v667
    %v780 = vsub.f32 0.0, %v668
    %v781 = vsub.f32 0.0, %v669
    %v782 = vsub.f32 0.0, %v670
    %v783 = vsub.f32 0.0, %v671
    %v784 = vsel %vm752, %v768, %v656
    %v785 = vsel %vm753, %v769, %v657
    %v786 = vsel %vm754, %v770, %v658
    %v787 = vsel %vm755, %v771, %v659
    %v788 = vsel %vm756, %v772, %v660
    %v789 = vsel %vm757, %v773, %v661
    %v790 = vsel %vm758, %v774, %v662
    %v791 = vsel %vm759, %v775, %v663
    %v792 = vsel %vm760, %v776, %v664
    %v793 = vsel %vm761, %v777, %v665
    %v794 = vsel %vm762, %v778, %v666
    %v795 = vsel %vm763, %v779, %v667
    %v796 = vsel %vm764, %v780, %v668
    %v797 = vsel %vm765, %v781, %v669
    %v798 = vsel %vm766, %v782, %v670
    %v799 = vsel %vm767, %v783, %v671
    %800 = vst [vmem:[#allocation2] sm:$0xff] %v704
    %801 = vst [vmem:[#allocation2 + $0x8] sm:$0xff] %v705
    %802 = vst [vmem:[#allocation2 + $0x10] sm:$0xff] %v706
    %803 = vst [vmem:[#allocation2 + $0x18] sm:$0xff] %v707
    %804 = vst [vmem:[#allocation2 + $0x20] sm:$0xff] %v708
    %805 = vst [vmem:[#allocation2 + $0x28] sm:$0xff] %v709
    %806 = vst [vmem:[#allocation2 + $0x30] sm:$0xff] %v710
    %807 = vst [vmem:[#allocation2 + $0x38] sm:$0xff] %v711
    %808 = vst [vmem:[#allocation2 + $0x40] sm:$0xff] %v712
    %809 = vst [vmem:[#allocation2 + $0x48] sm:$0xff] %v713
    %810 = vst [vmem:[#allocation2 + $0x50] sm:$0xff] %v714
    %811 = vst [vmem:[#allocation2 + $0x58] sm:$0xff] %v715
    %812 = vst [vmem:[#allocation2 + $0x60] sm:$0xff] %v716
    %813 = vst [vmem:[#allocation2 + $0x68] sm:$0xff] %v717
    %814 = vst [vmem:[#allocation2 + $0x70] sm:$0xff] %v718
    %815 = vst [vmem:[#allocation2 + $0x78] sm:$0xff] %v719
    %816 = vst [vmem:[#allocation2 + $0x80] sm:$0xff] %v784
    %817 = vst [vmem:[#allocation2 + $0x88] sm:$0xff] %v785
    %818 = vst [vmem:[#allocation2 + $0x90] sm:$0xff] %v786
    %819 = vst [vmem:[#allocation2 + $0x98] sm:$0xff] %v787
    %820 = vst [vmem:[#allocation2 + $0xa0] sm:$0xff] %v788
    %821 = vst [vmem:[#allocation2 + $0xa8] sm:$0xff] %v789
    %822 = vst [vmem:[#allocation2 + $0xb0] sm:$0xff] %v790
    %823 = vst [vmem:[#allocation2 + $0xb8] sm:$0xff] %v791
    %824 = vst [vmem:[#allocation2 + $0xc0] sm:$0xff] %v792
    %825 = vst [vmem:[#allocation2 + $0xc8] sm:$0xff] %v793
    %826 = vst [vmem:[#allocation2 + $0xd0] sm:$0xff] %v794
    %827 = vst [vmem:[#allocation2 + $0xd8] sm:$0xff] %v795
    %828 = vst [vmem:[#allocation2 + $0xe0] sm:$0xff] %v796
    %829 = vst [vmem:[#allocation2 + $0xe8] sm:$0xff] %v797
    %830 = vst [vmem:[#allocation2 + $0xf0] sm:$0xff] %v798
    %831 = vst [vmem:[#allocation2 + $0xf8] sm:$0xff] %v799
    // Predicated region
    $region6: #{tpu_custom_call.1} parent=1 // pred_check
      _
    $region7: #{tpu_custom_call.1} parent=1 // pred_check_branch
      %833 = sbr.rel (0) target = $region9
    $region8: #{tpu_custom_call.1} parent=1 // pred_region
      %s835 = ssub.s32 4096, 4096
      %836 = vsyncadd [#allocation3], %s835
      %s837 = sshll.u32 [#allocation2], 4
      %s838 = int_to_ptr.vmem [resolvable:$true] %s837
      %843 = dma.vmem_to_hbm [thread:$0]  %s838, 4096, %s1, [#allocation3], 256, 256, 16
    $region9: #{tpu_custom_call.1} parent=1 // pred_fallthru
      _
    // Predicated region
    $region10: #{tpu_custom_call.1} parent=1 // pred_check
      _
    $region11: #{tpu_custom_call.1} parent=1 // pred_check_branch
      %845 = sbr.rel (0) target = $region13
    $region12: #{tpu_custom_call.1} parent=1 // pred_region
      %846 = dma.done [#allocation3], 4096
    $region13: #{tpu_custom_call.1} parent=1 // pred_fallthru
      _
    %847 = vsyncpa [#allocation3], 1

</llo_original>
